<compile_context>
chip_gen: v6e
topology: v6e:2x2x1
jax: 0.10.0
libtpu: 0.0.40
codegen_flags: <defaults>
</compile_context>

<pallas_src>
import math

import jax
import jax.numpy as jnp
from jax.experimental import pallas as pl
from jax.experimental.pallas import tpu as pltpu

_MIB = 1024 * 1024


def _round_up(x: int, m: int) -> int:
    return (x + m - 1) // m * m


def _tpu_hw():
    """Returns (per-core VMEM capacity bytes, is_multi_tensorcore_chip)."""
    kind = ""
    try:
        kind = jax.devices()[0].device_kind.lower()
    except Exception:
        pass
    vmem = None
    try:
        vmem = int(pltpu.get_tpu_info().vmem_capacity_bytes)
    except Exception:
        vmem = None
    multi_tc = ("v7" in kind) or (vmem is not None and vmem <= 64 * _MIB)
    if vmem is None:
        vmem = 64 * _MIB if multi_tc else 128 * _MIB
    return vmem, multi_tc


def _linear_probe_kernel(x_ref, w_ref, b_ref, o_ref):
    """One (tm, tn) f32 output tile; grid axis 2 (k) is the reduction.

    The output block index is constant across k, so o_ref stays resident in
    VMEM and doubles as the accumulator (bias folded in at k == 0).  The x
    tile is cast to the weight dtype (bf16 by default) on the VPU right
    before the MXU dot, fusing the compute-dtype cast into the single pass
    over the activations.
    """
    k = pl.program_id(2)

    @pl.when(k == 0)
    def _():
        o_ref[...] = jnp.broadcast_to(b_ref[...], o_ref.shape)

    o_ref[...] += jnp.dot(
        x_ref[...].astype(w_ref.dtype), w_ref[...],
        preferred_element_type=jnp.float32,
    )


def linear_probe_matmul(x2d, w_t, b2d, *, k_start_col, k_cols, tk_options,
                        tm_cap=512):
    """y = x2d[:, k_start_col : k_start_col + k_cols] @ w_t + b2d  (f32 out).

    x2d: [M, Kx] (any float dtype; cast to w_t.dtype inside the kernel)
    w_t: [k_cols, Np] pre-transposed / pre-cast weight, Np % 128 == 0
    b2d: [1, Np] float32
    tk_options: candidate K tiles; each must be a multiple of 128 and divide
        both k_start_col and k_cols (guaranteed by the caller).
    """
    M, Kx = x2d.shape
    Kw, Np = w_t.shape
    assert Kw == k_cols, (Kw, k_cols)
    assert b2d.shape == (1, Np), b2d.shape
    assert k_start_col + k_cols <= Kx, (k_start_col, k_cols, Kx)
    assert Np % 128 == 0, Np
    assert tk_options, "need at least one K-tile candidate"
    for t in tk_options:
        assert t % 128 == 0 and k_cols % t == 0 and k_start_col % t == 0, t

    x_bytes = jnp.dtype(x2d.dtype).itemsize
    w_bytes = jnp.dtype(w_t.dtype).itemsize

    vmem_cap, multi_tc = _tpu_hw()
    # Per-generation scoped-VMEM ceiling with headroom below physical capacity.
    gen_cap = max(min(vmem_cap - 12 * _MIB, 100 * _MIB), 32 * _MIB)

    # tm: whole batch when it fits (no padding; block dim == full dim is legal
    # even when M % 8 != 0); ragged 512-row blocks otherwise.
    tm = M if M <= tm_cap else tm_cap

    # tn: single-TC v5e/v6e -> whole N so x is streamed from HBM exactly once;
    # v7x -> 2 column blocks so the weight stream splits across the 2 TCs.
    if multi_tc and Np % 256 == 0:
        tn = Np // 2
    else:
        tn = Np

    def footprint(tk):
        # double-buffered x / w / f32-bias inputs + resident f32 output tiles
        return (2 * (tm * tk * x_bytes + tk * tn * w_bytes + tn * 4)
                + 2 * tm * tn * 4)

    budget = gen_cap - 8 * _MIB
    fitting = [t for t in tk_options if footprint(t) <= budget]
    tk = max(fitting) if fitting else min(tk_options)
    vmem_limit = int(min(max(32 * _MIB, footprint(tk) + 8 * _MIB), gen_cap))

    k0 = k_start_col // tk
    grid = (pl.cdiv(M, tm), Np // tn, k_cols // tk)

    cost = pl.CostEstimate(
        flops=2 * M * k_cols * Np,
        transcendentals=0,
        bytes_accessed=(grid[1] * M * k_cols * x_bytes
                        + grid[0] * k_cols * Np * w_bytes
                        + M * Np * 4 + Np * 4),
    )

    return pl.pallas_call(
        _linear_probe_kernel,
        out_shape=jax.ShapeDtypeStruct((M, Np), jnp.float32),
        grid_spec=pltpu.PrefetchScalarGridSpec(
            num_scalar_prefetch=0,
            grid=grid,
            in_specs=[
                pl.BlockSpec((tm, tk), lambda i, j, k: (i, k0 + k)),   # x tile
                pl.BlockSpec((tk, tn), lambda i, j, k: (k, j)),        # w tile
                pl.BlockSpec((1, tn), lambda i, j, k: (0, j)),         # bias
            ],
            out_specs=pl.BlockSpec((tm, tn), lambda i, j, k: (i, j)),
        ),
        compiler_params=pltpu.CompilerParams(
            dimension_semantics=("parallel", "parallel", "arbitrary"),
            vmem_limit_bytes=vmem_limit,
        ),
        cost_estimate=cost,
    )(x2d, w_t, b2d)


class LinearProbe:
    """JAX/Pallas port of the PyTorch LinearProbe."""

    def __init__(self, d_res: int = 3072, d_sonar: int = 1024,
                 n_layers_to_use: int = 24, *, key=None,
                 compute_dtype=jnp.bfloat16):
        if key is None:
            key = jax.random.PRNGKey(0)
        self.d_res = d_res
        self.d_sonar = d_sonar
        self.n_layers_to_use = n_layers_to_use
        self.compute_dtype = compute_dtype
        d_in = d_res * n_layers_to_use
        self._d_in = d_in

        kw, kb = jax.random.split(key)
        bound = 1.0 / math.sqrt(d_in)          # nn.Linear default init
        self.weight = jax.random.uniform(kw, (d_sonar, d_in), jnp.float32,
                                         -bound, bound)
        self.bias = jax.random.uniform(kb, (d_sonar,), jnp.float32,
                                       -bound, bound)

        # All static prep happens ONCE here (never per forward): transpose,
        # compute-dtype cast, and alignment padding of weight / bias.
        self._Kp = _round_up(d_in, 128)
        self._Np = _round_up(d_sonar, 128)
        w_t = self.weight.T.astype(compute_dtype)           # [d_in, d_sonar]
        if (self._Kp, self._Np) != (d_in, d_sonar):
            w_t = jnp.pad(w_t, ((0, self._Kp - d_in), (0, self._Np - d_sonar)))
        b2 = self.bias.reshape(1, -1)
        if self._Np != d_sonar:
            b2 = jnp.pad(b2, ((0, 0), (0, self._Np - d_sonar)))
        self.w_t = w_t
        self.bias_2d = b2
        self._k_aligned = (self._Kp == d_in)

    def __call__(self, x):
        # x: [..., n_layers_total, d_res]
        n, d_res = self.n_layers_to_use, self.d_res
        assert x.shape[-1] == d_res and x.shape[-2] >= n, x.shape
        lead = x.shape[:-2]
        L = x.shape[-2]
        extra = L - n
        M = math.prod(lead) if lead else 1

        # Fused fast path: the layer slice is expressed purely as a K-axis
        # offset in the x index_map (tk = whole layers), so the kernel is the
        # only pass over x (no slice / flatten-copy / cast pass).
        tk_options = []
        if self._k_aligned:
            tk_options = [lk * d_res for lk in range(1, n + 1)
                          if n % lk == 0 and extra % lk == 0
                          and (lk * d_res) % 128 == 0]

        if tk_options:
            x2d = x.reshape(M, L * d_res)        # collapsing reshape: no copy
            y = linear_probe_matmul(
                x2d, self.w_t, self.bias_2d,
                k_start_col=extra * d_res, k_cols=self._d_in,
                tk_options=tk_options)
        else:
            # TODO(synk): slow fallback for shapes that cannot be tiled in
            # whole layers (lk*d_res never a multiple of 128); materialises the
            # layer slice and zero K padding per forward.
            x_flat = x[..., -n:, :].reshape(M, self._d_in)
            if self._Kp != self._d_in:
                x_flat = jnp.pad(x_flat, ((0, 0), (0, self._Kp - self._d_in)))
            fallback_tks = [t for t in range(128, self._Kp + 1, 128)
                            if self._Kp % t == 0]
            y = linear_probe_matmul(
                x_flat, self.w_t, self.bias_2d,
                k_start_col=0, k_cols=self._Kp, tk_options=fallback_tks)

        if self._Np != self.d_sonar:
            y = y[:, :self.d_sonar]
        return y.reshape(*lead, self.d_sonar)


if __name__ == "__main__":
    def reference(probe, xin):
        xf = xin[..., -probe.n_layers_to_use:, :]
        xf = xf.reshape(*xf.shape[:-2], -1)
        return xf @ probe.weight.T + probe.bias

    key = jax.random.PRNGKey(0)
    k_x1, k_x2, k_x3, k_p1, k_p2, k_p3 = jax.random.split(key, 6)

    # Small shapes consistent with the module (real probe: d_res=3072,
    # d_sonar=1024, n_layers_to_use=24).
    d_res, d_sonar, n_use, n_total = 128, 256, 4, 6

    # 1) f32 compute path, multi-dim leading batch (2*3=6 rows, deliberately
    #    not a multiple of 8), last 4 of 6 layers: tight tolerance check.
    probe_f32 = LinearProbe(d_res, d_sonar, n_use, key=k_p1,
                            compute_dtype=jnp.float32)
    x1 = jax.random.normal(k_x1, (2, 3, n_total, d_res), jnp.float32)
    y1 = jax.block_until_ready(probe_f32(x1))
    assert y1.shape == (2, 3, d_sonar)
    assert jnp.allclose(y1, reference(probe_f32, x1), atol=1e-4, rtol=1e-4)

    # 2) bf16 compute path (default: halves weight HBM traffic, native MXU
    #    rate) with f32 accumulation: looser tolerance vs the f32 reference.
    probe_bf16 = LinearProbe(d_res, d_sonar, n_use, key=k_p2)
    x2 = jax.random.normal(k_x2, (6, n_total, d_res), jnp.float32)
    y2 = jax.block_until_ready(probe_bf16(x2))
    assert y2.shape == (6, d_sonar)
    assert jnp.allclose(y2, reference(probe_bf16, x2), atol=5e-2, rtol=5e-2)

    # 3) unaligned fallback path (d_res not a multiple of 128 -> K padding,
    #    weight padded at init, activations padded per forward).
    probe_fb = LinearProbe(64, 128, 3, key=k_p3, compute_dtype=jnp.float32)
    x3 = jax.random.normal(k_x3, (4, 5, 64), jnp.float32)
    y3 = jax.block_until_ready(probe_fb(x3))
    assert y3.shape == (4, 128)
    assert jnp.allclose(y3, reference(probe_fb, x3), atol=1e-4, rtol=1e-4)

    print("KERNEL_OK")
</pallas_src>

<mosaic_0001>
module attributes {stable_mosaic.version = 11 : i64} {
  func.func @_linear_probe_kernel(%arg0: i32, %arg1: i32, %arg2: i32, %arg3: memref<6x256xf32, #tpu.memory_space<vmem>>, %arg4: memref<256x256xf32, #tpu.memory_space<vmem>>, %arg5: memref<1x256xf32, #tpu.memory_space<vmem>>, %arg6: memref<6x256xf32, #tpu.memory_space<vmem>>) attributes {dimension_semantics = [#tpu.dimension_semantics<parallel>, #tpu.dimension_semantics<parallel>, #tpu.dimension_semantics<arbitrary>], iteration_bounds = array<i64: 1, 1, 2>, scalar_prefetch = 0 : i64, scratch_operands = 0 : i64, tpu.core_type = #tpu.core_type<tc>, window_params = [{transform_indices = @transform_0, window_bounds = array<i64: 6, 256>}, {transform_indices = @transform_1, window_bounds = array<i64: 256, 256>}, {transform_indices = @transform_2, window_bounds = array<i64: 1, 256>}, {transform_indices = @transform_3, window_bounds = array<i64: 6, 256>}]} {
    %c0_i32 = arith.constant 0 : i32
    %0 = arith.cmpi eq, %arg2, %c0_i32 : i32
    %1 = arith.extui %0 : i1 to i32
    %c0_i32_0 = arith.constant 0 : i32
    %2 = arith.cmpi ne, %1, %c0_i32_0 : i32
    scf.if %2 {
      %c0_8 = arith.constant 0 : index
      %c0_9 = arith.constant 0 : index
      %9 = vector.load %arg5[%c0_8, %c0_9] : memref<1x256xf32, #tpu.memory_space<vmem>>, vector<1x256xf32>
      %10 = vector.shape_cast %9 : vector<1x256xf32> to vector<1x256xf32>
      %11 = vector.broadcast %10 : vector<1x256xf32> to vector<6x256xf32>
      %c0_10 = arith.constant 0 : index
      %c0_11 = arith.constant 0 : index
      %12 = vector.load %arg6[%c0_10, %c0_11] : memref<6x256xf32, #tpu.memory_space<vmem>>, vector<6x256xf32>
      tpu.vector_store %arg6[%c0_10, %c0_11], %11 {strides = array<i32>} : memref<6x256xf32, #tpu.memory_space<vmem>>, vector<6x256xf32>,
    } else {
    }
    %c0 = arith.constant 0 : index
    %c0_1 = arith.constant 0 : index
    %3 = vector.load %arg6[%c0, %c0_1] : memref<6x256xf32, #tpu.memory_space<vmem>>, vector<6x256xf32>
    %c0_2 = arith.constant 0 : index
    %c0_3 = arith.constant 0 : index
    %4 = vector.load %arg3[%c0_2, %c0_3] : memref<6x256xf32, #tpu.memory_space<vmem>>, vector<6x256xf32>
    %c0_4 = arith.constant 0 : index
    %c0_5 = arith.constant 0 : index
    %5 = vector.load %arg4[%c0_4, %c0_5] : memref<256x256xf32, #tpu.memory_space<vmem>>, vector<256x256xf32>
    %cst = arith.constant dense<0.000000e+00> : vector<6x256xf32>
    %6 = tpu.matmul %4, %5, %cst {dimension_numbers = #tpu.dot_dimension_numbers<[1], [0], [0], [1], [0, 0, 1, 1], [], []>} : vector<6x256xf32>, vector<256x256xf32>, vector<6x256xf32> -> vector<6x256xf32>
    %7 = arith.addf %3, %6 : vector<6x256xf32>
    %c0_6 = arith.constant 0 : index
    %c0_7 = arith.constant 0 : index
    %8 = vector.load %arg6[%c0_6, %c0_7] : memref<6x256xf32, #tpu.memory_space<vmem>>, vector<6x256xf32>
    tpu.vector_store %arg6[%c0_6, %c0_7], %7 {strides = array<i32>} : memref<6x256xf32, #tpu.memory_space<vmem>>, vector<6x256xf32>,
    return
  }
  func.func @transform_0(%arg0: i32, %arg1: i32, %arg2: i32) -> (i32, i32) {
    %c1_i32 = arith.constant 1 : i32
    %0 = arith.addi %c1_i32, %arg2 : i32
    %c0_i32 = arith.constant 0 : i32
    return %arg0, %0 : i32, i32
  }
  func.func @transform_1(%arg0: i32, %arg1: i32, %arg2: i32) -> (i32, i32) {
    %c0_i32 = arith.constant 0 : i32
    return %arg2, %arg1 : i32, i32
  }
  func.func @transform_2(%arg0: i32, %arg1: i32, %arg2: i32) -> (i32, i32) {
    %c0_i32 = arith.constant 0 : i32
    %c0_i32_0 = arith.constant 0 : i32
    return %c0_i32, %arg1 : i32, i32
  }
  func.func @transform_3(%arg0: i32, %arg1: i32, %arg2: i32) -> (i32, i32) {
    %c0_i32 = arith.constant 0 : i32
    return %arg0, %arg1 : i32, i32
  }
}

</mosaic_0001>

<llo_original>
// kernel: tpu_custom_call.1
$region0: #{tpu_custom_call.1}
  #allocation0 [shape = 'u32[]', space=smem, size = 0x4, offset = 0x4, fixed_abs, tag = 'smem constant byte address 0x4 - core index']
  #allocation1 [shape = 'u32[144,128]{1,0:T(1,128)}', space=vmem, size = 0x12000, scoped, tag = 'internal scratch']
  %s0 = inlined_call_operand.hbm [shape: f32[6,768], index: 0, kind: input, shape index: {}]
  %s1 = inlined_call_operand.hbm [shape: f32[512,256], index: 1, kind: input, shape index: {}]
  %s2 = inlined_call_operand.vmem [shape: f32[1,256], index: 2, kind: input, shape index: {}]
  %s3 = inlined_call_operand.hbm [shape: f32[6,256], index: 3, kind: output, shape index: {}]
  %s4 = sld [smem:[#allocation0]]
  $region57: #{tpu_custom_call.1} parent=0
    _
  %s6 = ssub.s32 1, %s4
  %s7 = scalar_select 0, %s6, %s4
  $region1: #{tpu_custom_call.1} parent=0
    #allocation2 [shape = 'u8[16384]{0}', space=vmem, size = 0x4000, scoped, tag = 'input window, operand 0']
    #allocation3 [shape = 's32[2]{0}', space=sflag, size = 0x8, scoped, tag = 'scoped memory for tpu_custom_call.1']
    #allocation4 [shape = 's32[2]{0}', space=sflag, size = 0x8, scoped, tag = 'scoped memory for tpu_custom_call.1']
    #allocation5 [shape = 'u8[524288]{0}', space=vmem, size = 0x80000, scoped, tag = 'input window, operand 1']
    #allocation6 [shape = 's32[2]{0}', space=sflag, size = 0x8, scoped, tag = 'scoped memory for tpu_custom_call.1']
    #allocation7 [shape = 'u8[8192]{0}', space=vmem, size = 0x2000, scoped, tag = 'output window, operand 0, single buffered']
    %8 = vsyncpa [#allocation3], 0
    %s9 = scalar_lea.sflag [#allocation3], 1
    %10 = vsyncpa %s9, 0
    %11 = vsyncpa [#allocation6], 0
    %s12 = scalar_lea.sflag [#allocation6], 1
    %13 = vsyncpa %s12, 0
    %14 = vsyncpa [#allocation4], 0
    loop: start=0, step=1, limit=4
    $region2: #{tpu_custom_call.1} parent=1 // loop_pre_header
      _
    $region3: #{tpu_custom_call.1} parent=1 // loop_header
      %s16 = sphi 0, %s20
      %p17 = scmp.ge.s32.totalorder %s16, 4
      %s23 = sphi 0, %s42
      %s24 = sphi 0, %s38
      %s25 = sphi 0, %s34
      %s26 = sphi 0, %s23
      %s27 = sphi 0, %s24
      %s28 = sphi 0, %s25
      %s29 = sphi 0, %s26
      %s30 = sphi 0, %s27
      %s31 = sphi 0, %s28
      %s49 = sphi 0, %s51
      %s52 = sphi 0, %s49
      %s53 = sphi 0, %s52
      %s69 = sphi 0, %s53
      %s77 = sphi 0, %s79
      %s80 = sphi 0, %s77
      %s81 = sphi 0, %s80
      %s97 = sphi 0, %s81
      %s103 = sphi 0, %s105
      %s106 = sphi 0, %s103
      %s107 = sphi 0, %s106
      %s123 = sphi 0, %s107
      %s131 = sphi 0, %s133
      %s134 = sphi 0, %s131
      %s135 = sphi 0, %s134
      %s151 = sphi 0, %s135
    $region4: #{tpu_custom_call.1} parent=1 // loop_header_branch
      %19 = sbr.rel (%p17) target = $region8
    $region5: #{tpu_custom_call.1} parent=1 // loop_body
      %s21 = ssub.s32 %s16, 1
      %s22 = ssub.s32 %s16, 2
      %s32 = sadd.s32 1, %s25
      %p33 = scmp.ge.s32.totalorder %s32, 2
      %s34 = scalar_select %p33, 0, %s32
      %s35 = sadd.s32 1, %s24
      %s36 = scalar_select %p33, %s35, %s24
      %p37 = scmp.ge.s32.totalorder %s36, 1
      %s38 = scalar_select %p37, 0, %s36
      %s39 = sadd.s32 1, %s23
      %s40 = scalar_select %p37, %s39, %s23
      %p41 = scmp.ge.s32.totalorder %s40, 1
      %s42 = scalar_select %p41, 0, %s40
      %s43 = sadd.s32 %s25, 1
      %s44 = sadd.s32 %s34, 1
      %s45 = ssub.s32 %s23, %s42
      %s46 = ssub.s32 %s43, %s44
      %s47 = sor.u32 %s45, %s46
      %p48 = scmp.eq.s32.totalorder %s47, 0
      %s50 = sadd.s32 %s49, 1
      %s51 = scalar_select %p48, %s49, %s50
      %p54 = pneg %p48
      %p55 = scmp.eq.s32.totalorder %s16, 1
      %p56 = por %p54, %p55
      %p57 = scmp.ne.s32.totalorder %s49, %s52
      %p58 = scmp.eq.s32.totalorder %s16, 0
      %p59 = por %p57, %p58
      %p60 = scmp.ne.s32.totalorder %s49, %s52
      %p61 = scmp.eq.s32.totalorder %s21, 1
      %p62 = por %p60, %p61
      %p63 = scmp.ne.s32.totalorder %s52, %s53
      %p64 = scmp.eq.s32.totalorder %s21, 0
      %p65 = por %p63, %p64
      %p66 = scmp.ne.s32.totalorder %s52, %s53
      %p67 = scmp.eq.s32.totalorder %s22, 1
      %p68 = por %p66, %p67
      %p70 = scmp.ne.s32.totalorder %s53, %s69
      %p71 = scmp.eq.s32.totalorder %s22, 0
      %p72 = por %p70, %p71
      %s73 = ssub.s32 %s25, %s34
      %s74 = ssub.s32 %s24, %s38
      %s75 = sor.u32 %s73, %s74
      %p76 = scmp.eq.s32.totalorder %s75, 0
      %s78 = sadd.s32 %s77, 1
      %s79 = scalar_select %p76, %s77, %s78
      %p82 = pneg %p76
      %p83 = scmp.eq.s32.totalorder %s16, 1
      %p84 = por %p82, %p83
      %p85 = scmp.ne.s32.totalorder %s77, %s80
      %p86 = scmp.eq.s32.totalorder %s16, 0
      %p87 = por %p85, %p86
      %p88 = scmp.ne.s32.totalorder %s77, %s80
      %p89 = scmp.eq.s32.totalorder %s21, 1
      %p90 = por %p88, %p89
      %p91 = scmp.ne.s32.totalorder %s80, %s81
      %p92 = scmp.eq.s32.totalorder %s21, 0
      %p93 = por %p91, %p92
      %p94 = scmp.ne.s32.totalorder %s80, %s81
      %p95 = scmp.eq.s32.totalorder %s22, 1
      %p96 = por %p94, %p95
      %p98 = scmp.ne.s32.totalorder %s81, %s97
      %p99 = scmp.eq.s32.totalorder %s22, 0
      %p100 = por %p98, %p99
      %s101 = ssub.s32 %s24, %s38
      %p102 = scmp.eq.s32.totalorder %s101, 0
      %s104 = sadd.s32 %s103, 1
      %s105 = scalar_select %p102, %s103, %s104
      %p108 = pneg %p102
      %p109 = scmp.eq.s32.totalorder %s16, 1
      %p110 = por %p108, %p109
      %p111 = scmp.ne.s32.totalorder %s103, %s106
      %p112 = scmp.eq.s32.totalorder %s16, 0
      %p113 = por %p111, %p112
      %p114 = scmp.ne.s32.totalorder %s103, %s106
      %p115 = scmp.eq.s32.totalorder %s21, 1
      %p116 = por %p114, %p115
      %p117 = scmp.ne.s32.totalorder %s106, %s107
      %p118 = scmp.eq.s32.totalorder %s21, 0
      %p119 = por %p117, %p118
      %p120 = scmp.ne.s32.totalorder %s106, %s107
      %p121 = scmp.eq.s32.totalorder %s22, 1
      %p122 = por %p120, %p121
      %p124 = scmp.ne.s32.totalorder %s107, %s123
      %p125 = scmp.eq.s32.totalorder %s22, 0
      %p126 = por %p124, %p125
      %s127 = ssub.s32 %s23, %s42
      %s128 = ssub.s32 %s24, %s38
      %s129 = sor.u32 %s127, %s128
      %p130 = scmp.eq.s32.totalorder %s129, 0
      %s132 = sadd.s32 %s131, 1
      %s133 = scalar_select %p130, %s131, %s132
      %p136 = pneg %p130
      %p137 = scmp.eq.s32.totalorder %s16, 1
      %p138 = por %p136, %p137
      %p139 = scmp.ne.s32.totalorder %s131, %s134
      %p140 = scmp.eq.s32.totalorder %s16, 0
      %p141 = por %p139, %p140
      %p142 = scmp.ne.s32.totalorder %s131, %s134
      %p143 = scmp.eq.s32.totalorder %s21, 1
      %p144 = por %p142, %p143
      %p145 = scmp.ne.s32.totalorder %s134, %s135
      %p146 = scmp.eq.s32.totalorder %s21, 0
      %p147 = por %p145, %p146
      %p148 = scmp.ne.s32.totalorder %s134, %s135
      %p149 = scmp.eq.s32.totalorder %s22, 1
      %p150 = por %p148, %p149
      %p152 = scmp.ne.s32.totalorder %s135, %s151
      %p153 = scmp.eq.s32.totalorder %s22, 0
      %p154 = por %p152, %p153
      %p155 = scmp.le.s32.totalorder 1, %s16
      %p156 = scmp.lt.s32.totalorder %s16, 3
      %p157 = pnand %p155, %p156
      %p158 = pneg %p157
      // Predicated region
      $region9: #{tpu_custom_call.1} parent=5 // pred_check
        _
      $region10: #{tpu_custom_call.1} parent=5 // pred_check_branch
        %160 = sbr.rel (%p157) target = $region12
      $region11: #{tpu_custom_call.1} parent=5 // pred_region
        %s161 = ssub.s32 %s16, 1
        // Predicated region
        $region13: #{tpu_custom_call.1} parent=11 // pred_check
          %p162 = pneg %p119
        $region14: #{tpu_custom_call.1} parent=11 // pred_check_branch
          %164 = sbr.rel (%p162) target = $region16
        $region15: #{tpu_custom_call.1} parent=11 // pred_region
          %s165 = smul.u32 2, %s27
          %p166 = scmp.lt.s32.totalorder %s165, 1
          %s167 = scalar_select %p166, %s165, 1
          %s168 = scalar_lea.vmem %s2, %s167
          %s169 = smul.u32 2, %s27
        $region16: #{tpu_custom_call.1} parent=11 // pred_fallthru
          _
      $region12: #{tpu_custom_call.1} parent=5 // pred_fallthru
        _
      %p170 = scmp.lt.s32.totalorder %s16, 2
      // Predicated region
      $region17: #{tpu_custom_call.1} parent=5 // pred_check
        %p171 = pneg %p170
      $region18: #{tpu_custom_call.1} parent=5 // pred_check_branch
        %173 = sbr.rel (%p171) target = $region20
      $region19: #{tpu_custom_call.1} parent=5 // pred_region
        // Predicated region
        $region21: #{tpu_custom_call.1} parent=19 // pred_check
          %p174 = pneg %p59
        $region22: #{tpu_custom_call.1} parent=19 // pred_check_branch
          %176 = sbr.rel (%p174) target = $region24
        $region23: #{tpu_custom_call.1} parent=19 // pred_region
          %s177 = sand.u32 %s49, 1
          %s178 = scalar_lea.sflag [#allocation3], %s177
          %s179 = sand.u32 %s49, 1
          %s180 = smul.addr %s179, 16
          %s181 = scalar_lea.vmem [#allocation2], %s180
          %s182 = sadd.s32 %s25, 1
          %s183 = smul.u32 2, %s182
          %s185 = ssub.s32 256, 256
          %186 = vsyncadd %s178, %s185
          %s187 = smul.addr %s23, 6
          %s188 = sadd.s32 %s183, %s187
          %s189 = smul.addr %s188, 128
          %s190 = scalar_lea.hbm %s0, %s189
          %s192 = sshll.u32 %s181, 4
          %s193 = int_to_ptr.vmem [resolvable:$true] %s192
          %195 = dma.hbm_to_vmem [thread:$0]  %s190, 256, %s193, %s178
        $region24: #{tpu_custom_call.1} parent=19 // pred_fallthru
          _
        // Predicated region
        $region25: #{tpu_custom_call.1} parent=19 // pred_check
          %p196 = pneg %p87
        $region26: #{tpu_custom_call.1} parent=19 // pred_check_branch
          %198 = sbr.rel (%p196) target = $region28
        $region27: #{tpu_custom_call.1} parent=19 // pred_region
          %s199 = sand.u32 %s77, 1
          %s200 = scalar_lea.sflag [#allocation6], %s199
          %s201 = sand.u32 %s77, 1
          %s202 = smul.addr %s201, 512
          %s203 = scalar_lea.vmem [#allocation5], %s202
          %s204 = smul.u32 32, %s25
          %s205 = smul.u32 2, %s24
          %s207 = ssub.s32 8192, 8192
          %208 = vsyncadd %s200, %s207
          %s209 = smul.addr %s204, 2
          %s210 = sadd.s32 %s205, %s209
          %s211 = smul.addr %s210, 128
          %s212 = scalar_lea.hbm %s1, %s211
          %s213 = sshll.u32 %s203, 4
          %s214 = int_to_ptr.vmem [resolvable:$true] %s213
          %219 = dma.hbm_to_vmem [thread:$0]  %s212, 8192, %s214, %s200, 256, 256, 16
        $region28: #{tpu_custom_call.1} parent=19 // pred_fallthru
          _
      $region20: #{tpu_custom_call.1} parent=5 // pred_fallthru
        _
      %p220 = scmp.le.s32.totalorder 1, %s16
      %p221 = scmp.lt.s32.totalorder %s16, 3
      %p222 = pnand %p220, %p221
      %p223 = pneg %p222
      // Predicated region
      $region29: #{tpu_custom_call.1} parent=5 // pred_check
        _
      $region30: #{tpu_custom_call.1} parent=5 // pred_check_branch
        %225 = sbr.rel (%p222) target = $region32
      $region31: #{tpu_custom_call.1} parent=5 // pred_region
        %s226 = ssub.s32 %s16, 1
        %s227 = sand.u32 %s52, 1
        %s228 = scalar_lea.sflag [#allocation3], %s227
        %s229 = sand.u32 %s52, 1
        %s230 = smul.addr %s229, 16
        %s231 = scalar_lea.vmem [#allocation2], %s230
        // Predicated region
        $region33: #{tpu_custom_call.1} parent=31 // pred_check
          %p232 = pneg %p65
        $region34: #{tpu_custom_call.1} parent=31 // pred_check_branch
          %234 = sbr.rel (%p232) target = $region36
        $region35: #{tpu_custom_call.1} parent=31 // pred_region
          %235 = dma.done %s228, 256
        $region36: #{tpu_custom_call.1} parent=31 // pred_fallthru
          _
        %s236 = sand.u32 %s80, 1
        %s237 = scalar_lea.sflag [#allocation6], %s236
        %s238 = sand.u32 %s80, 1
        %s239 = smul.addr %s238, 512
        %s240 = scalar_lea.vmem [#allocation5], %s239
        // Predicated region
        $region37: #{tpu_custom_call.1} parent=31 // pred_check
          %p241 = pneg %p93
        $region38: #{tpu_custom_call.1} parent=31 // pred_check_branch
          %243 = sbr.rel (%p241) target = $region40
        $region39: #{tpu_custom_call.1} parent=31 // pred_region
          %244 = dma.done %s237, 8192
        $region40: #{tpu_custom_call.1} parent=31 // pred_fallthru
          _
        %s245 = sand.u32 %s52, 1
        %s246 = scalar_lea.sflag [#allocation3], %s245
        %s247 = sand.u32 %s52, 1
        %s248 = smul.addr %s247, 16
        %s249 = scalar_lea.vmem [#allocation2], %s248
        %p250 = pneg %p65
        %p251 = pneg %p62
        %s252 = sand.u32 %s80, 1
        %s253 = scalar_lea.sflag [#allocation6], %s252
        %s254 = sand.u32 %s80, 1
        %s255 = smul.addr %s254, 512
        %s256 = scalar_lea.vmem [#allocation5], %s255
        %p257 = pneg %p93
        %p258 = pneg %p90
        %s259 = smul.u32 2, %s27
        %p260 = scmp.lt.s32.totalorder %s259, 1
        %s261 = scalar_select %p260, %s259, 1
        %s262 = scalar_lea.vmem %s2, %s261
        %p263 = pneg %p119
        %p264 = pneg %p116
        %p265 = pneg %p147
        %p266 = pneg %p144
        %s267 = sadd.s32 %s28, 1
        %s268 = smul.u32 2, %s267
        %s269 = smul.u32 32, %s28
        %s270 = smul.u32 2, %s27
        %s271 = smul.u32 2, %s27
        %p272 = scmp.lt.s32.totalorder %s271, 1
        %s273 = scalar_select %p272, %s271, 1
        %s274 = scalar_lea.vmem %s2, %s273
        %s275 = smul.u32 2, %s27
        %s276 = smul.u32 2, %s27
        %p277 = scmp.eq.s32.totalorder %s28, 0
        // Predicated region
        $region41: #{tpu_custom_call.1} parent=31 // pred_check
          %p278 = pneg %p277
        $region42: #{tpu_custom_call.1} parent=31 // pred_check_branch
          %280 = sbr.rel (%p278) target = $region44
        $region43: #{tpu_custom_call.1} parent=31 // pred_region
          %v281 = vld [vmem:[%s274] sm:$0x3]
          %v283 = vlaneseq
          %v284 = vshrl.u32 %v283, 7
          %v285 = vsub.s32 0, %v284
          %v286 = vrot.slane %v281, %v285
          %v287 = vlaneseq
          %v288 = vshrl.u32 %v287, 7
          %v289 = vsub.s32 1, %v288
          %v290 = vrot.slane %v281, %v289
          %293 = vst [vmem:[#allocation7] sm:$0x3f] %v286
          %294 = vst [vmem:[#allocation7 + $0x8] sm:$0x3f] %v290
        $region44: #{tpu_custom_call.1} parent=31 // pred_fallthru
          _
        %v295 = vld [vmem:[#allocation7] sm:$0x3f]
        %v296 = vld [vmem:[#allocation7 + $0x8] sm:$0x3f]
        %v297 = vld [vmem:[%s231] sm:$0x3f]
        %v298 = vld [vmem:[%s231 + $0x8] sm:$0x3f]
        %v299 = vld [vmem:[%s240] sm:$0xff]
        %v300 = vld [vmem:[%s240 + $0x8] sm:$0xff]
        %v301 = vld [vmem:[%s240 + $0x10] sm:$0xff]
        %v302 = vld [vmem:[%s240 + $0x18] sm:$0xff]
        %v303 = vld [vmem:[%s240 + $0x20] sm:$0xff]
        %v304 = vld [vmem:[%s240 + $0x28] sm:$0xff]
        %v305 = vld [vmem:[%s240 + $0x30] sm:$0xff]
        %v306 = vld [vmem:[%s240 + $0x38] sm:$0xff]
        %v307 = vld [vmem:[%s240 + $0x40] sm:$0xff]
        %v308 = vld [vmem:[%s240 + $0x48] sm:$0xff]
        %v309 = vld [vmem:[%s240 + $0x50] sm:$0xff]
        %v310 = vld [vmem:[%s240 + $0x58] sm:$0xff]
        %v311 = vld [vmem:[%s240 + $0x60] sm:$0xff]
        %v312 = vld [vmem:[%s240 + $0x68] sm:$0xff]
        %v313 = vld [vmem:[%s240 + $0x70] sm:$0xff]
        %v314 = vld [vmem:[%s240 + $0x78] sm:$0xff]
        %v315 = vld [vmem:[%s240 + $0x80] sm:$0xff]
        %v316 = vld [vmem:[%s240 + $0x88] sm:$0xff]
        %v317 = vld [vmem:[%s240 + $0x90] sm:$0xff]
        %v318 = vld [vmem:[%s240 + $0x98] sm:$0xff]
        %v319 = vld [vmem:[%s240 + $0xa0] sm:$0xff]
        %v320 = vld [vmem:[%s240 + $0xa8] sm:$0xff]
        %v321 = vld [vmem:[%s240 + $0xb0] sm:$0xff]
        %v322 = vld [vmem:[%s240 + $0xb8] sm:$0xff]
        %v323 = vld [vmem:[%s240 + $0xc0] sm:$0xff]
        %v324 = vld [vmem:[%s240 + $0xc8] sm:$0xff]
        %v325 = vld [vmem:[%s240 + $0xd0] sm:$0xff]
        %v326 = vld [vmem:[%s240 + $0xd8] sm:$0xff]
        %v327 = vld [vmem:[%s240 + $0xe0] sm:$0xff]
        %v328 = vld [vmem:[%s240 + $0xe8] sm:$0xff]
        %v329 = vld [vmem:[%s240 + $0xf0] sm:$0xff]
        %v330 = vld [vmem:[%s240 + $0xf8] sm:$0xff]
        %v331 = vld [vmem:[%s240 + $0x100] sm:$0xff]
        %v332 = vld [vmem:[%s240 + $0x108] sm:$0xff]
        %v333 = vld [vmem:[%s240 + $0x110] sm:$0xff]
        %v334 = vld [vmem:[%s240 + $0x118] sm:$0xff]
        %v335 = vld [vmem:[%s240 + $0x120] sm:$0xff]
        %v336 = vld [vmem:[%s240 + $0x128] sm:$0xff]
        %v337 = vld [vmem:[%s240 + $0x130] sm:$0xff]
        %v338 = vld [vmem:[%s240 + $0x138] sm:$0xff]
        %v339 = vld [vmem:[%s240 + $0x140] sm:$0xff]
        %v340 = vld [vmem:[%s240 + $0x148] sm:$0xff]
        %v341 = vld [vmem:[%s240 + $0x150] sm:$0xff]
        %v342 = vld [vmem:[%s240 + $0x158] sm:$0xff]
        %v343 = vld [vmem:[%s240 + $0x160] sm:$0xff]
        %v344 = vld [vmem:[%s240 + $0x168] sm:$0xff]
        %v345 = vld [vmem:[%s240 + $0x170] sm:$0xff]
        %v346 = vld [vmem:[%s240 + $0x178] sm:$0xff]
        %v347 = vld [vmem:[%s240 + $0x180] sm:$0xff]
        %v348 = vld [vmem:[%s240 + $0x188] sm:$0xff]
        %v349 = vld [vmem:[%s240 + $0x190] sm:$0xff]
        %v350 = vld [vmem:[%s240 + $0x198] sm:$0xff]
        %v351 = vld [vmem:[%s240 + $0x1a0] sm:$0xff]
        %v352 = vld [vmem:[%s240 + $0x1a8] sm:$0xff]
        %v353 = vld [vmem:[%s240 + $0x1b0] sm:$0xff]
        %v354 = vld [vmem:[%s240 + $0x1b8] sm:$0xff]
        %v355 = vld [vmem:[%s240 + $0x1c0] sm:$0xff]
        %v356 = vld [vmem:[%s240 + $0x1c8] sm:$0xff]
        %v357 = vld [vmem:[%s240 + $0x1d0] sm:$0xff]
        %v358 = vld [vmem:[%s240 + $0x1d8] sm:$0xff]
        %v359 = vld [vmem:[%s240 + $0x1e0] sm:$0xff]
        %v360 = vld [vmem:[%s240 + $0x1e8] sm:$0xff]
        %v361 = vld [vmem:[%s240 + $0x1f0] sm:$0xff]
        %v362 = vld [vmem:[%s240 + $0x1f8] sm:$0xff]
        %363 = vmatprep.subr.mxu0 %v330
        %364 = vmatpush1.msra.mxu0 %v329
        %365 = vmatprep.subr.mxu0 %v328
        %366 = vmatpush1.msra.mxu0 %v327
        %367 = vmatprep.subr.mxu0 %v326
        %368 = vmatpush1.msra.mxu0 %v325
        %369 = vmatprep.subr.mxu0 %v324
        %370 = vmatpush1.msra.mxu0 %v323
        %371 = vmatprep.subr.mxu0 %v322
        %372 = vmatpush1.msra.mxu0 %v321
        %373 = vmatprep.subr.mxu0 %v320
        %374 = vmatpush1.msra.mxu0 %v319
        %375 = vmatprep.subr.mxu0 %v318
        %376 = vmatpush1.msra.mxu0 %v317
        %377 = vmatprep.subr.mxu0 %v316
        %378 = vmatpush1.msra.mxu0 %v315
        %379 = vmatprep.subr.mxu0 %v314
        %380 = vmatpush1.msra.mxu0 %v313
        %381 = vmatprep.subr.mxu0 %v312
        %382 = vmatpush1.msra.mxu0 %v311
        %383 = vmatprep.subr.mxu0 %v310
        %384 = vmatpush1.msra.mxu0 %v309
        %385 = vmatprep.subr.mxu0 %v308
        %386 = vmatpush1.msra.mxu0 %v307
        %387 = vmatprep.subr.mxu0 %v306
        %388 = vmatpush1.msra.mxu0 %v305
        %389 = vmatprep.subr.mxu0 %v304
        %390 = vmatpush1.msra.mxu0 %v303
        %391 = vmatprep.subr.mxu0 %v302
        %392 = vmatpush1.msra.mxu0 %v301
        %393 = vmatprep.subr.mxu0 %v300
        %394 = vmatpush1.msra.mxu0 %v299
        %395 = vmatprep.subr.mxu0 %v362
        %396 = vmatpush2.msra.mxu0 %v361
        %397 = vmatprep.subr.mxu0 %v360
        %398 = vmatpush2.msra.mxu0 %v359
        %399 = vmatprep.subr.mxu0 %v358
        %400 = vmatpush2.msra.mxu0 %v357
        %401 = vmatprep.subr.mxu0 %v356
        %402 = vmatpush2.msra.mxu0 %v355
        %403 = vmatprep.subr.mxu0 %v354
        %404 = vmatpush2.msra.mxu0 %v353
        %405 = vmatprep.subr.mxu0 %v352
        %406 = vmatpush2.msra.mxu0 %v351
        %407 = vmatprep.subr.mxu0 %v350
        %408 = vmatpush2.msra.mxu0 %v349
        %409 = vmatprep.subr.mxu0 %v348
        %410 = vmatpush2.msra.mxu0 %v347
        %411 = vmatprep.subr.mxu0 %v346
        %412 = vmatpush2.msra.mxu0 %v345
        %413 = vmatprep.subr.mxu0 %v344
        %414 = vmatpush2.msra.mxu0 %v343
        %415 = vmatprep.subr.mxu0 %v342
        %416 = vmatpush2.msra.mxu0 %v341
        %417 = vmatprep.subr.mxu0 %v340
        %418 = vmatpush2.msra.mxu0 %v339
        %419 = vmatprep.subr.mxu0 %v338
        %420 = vmatpush2.msra.mxu0 %v337
        %421 = vmatprep.subr.mxu0 %v336
        %422 = vmatpush2.msra.mxu0 %v335
        %423 = vmatprep.subr.mxu0 %v334
        %424 = vmatpush2.msra.mxu0 %v333
        %425 = vmatprep.subr.mxu0 %v332
        %426 = vmatpush2.msra.mxu0 %v331
        %427 = vmatprep.mubr.f32.mxu0 %v298
        %428 = vmatmul.mubr.f32.gmra.mxu0 %v297
        %v429 = vpop.f32.mrf.mxu0
        %v430 = vadd.f32 0.0, %v429
        %v431 = vpop.f32.mrf.mxu0
        %v432 = vadd.f32 0.0, %v431
        %433 = vdwg.mxu0
        %v434 = vadd.f32 %v295, %v430
        %v435 = vadd.f32 %v296, %v432
        %436 = vst [vmem:[#allocation7] sm:$0x3f] %v434
        %437 = vst [vmem:[#allocation7 + $0x8] sm:$0x3f] %v435
        // Predicated region
        $region45: #{tpu_custom_call.1} parent=31 // pred_check
          %p438 = pneg %p144
        $region46: #{tpu_custom_call.1} parent=31 // pred_check_branch
          %440 = sbr.rel (%p438) target = $region48
        $region47: #{tpu_custom_call.1} parent=31 // pred_region
          %s441 = smul.u32 2, %s27
          %s443 = ssub.s32 256, 256
          %444 = vsyncadd [#allocation4], %s443
          %s445 = smul.addr %s26, 2
          %s446 = sadd.s32 %s441, %s445
          %s447 = smul.addr %s446, 128
          %s448 = scalar_lea.hbm %s3, %s447
          %s450 = sshll.u32 [#allocation7], 4
          %s451 = int_to_ptr.vmem [resolvable:$true] %s450
          %453 = dma.vmem_to_hbm [thread:$0]  %s451, 256, %s448, [#allocation4]
        $region48: #{tpu_custom_call.1} parent=31 // pred_fallthru
          _
        // Predicated region
        $region49: #{tpu_custom_call.1} parent=31 // pred_check
          %p454 = pneg %p144
        $region50: #{tpu_custom_call.1} parent=31 // pred_check_branch
          %456 = sbr.rel (%p454) target = $region52
        $region51: #{tpu_custom_call.1} parent=31 // pred_region
          %457 = dma.done [#allocation4], 256
        $region52: #{tpu_custom_call.1} parent=31 // pred_fallthru
          _
      $region32: #{tpu_custom_call.1} parent=5 // pred_fallthru
        _
      %p458 = scmp.le.s32.totalorder 2, %s16
      // Predicated region
      $region53: #{tpu_custom_call.1} parent=5 // pred_check
        %p459 = pneg %p458
      $region54: #{tpu_custom_call.1} parent=5 // pred_check_branch
        %461 = sbr.rel (%p459) target = $region56
      $region55: #{tpu_custom_call.1} parent=5 // pred_region
        %s462 = ssub.s32 %s16, 2
      $region56: #{tpu_custom_call.1} parent=5 // pred_fallthru
        _
    $region6: #{tpu_custom_call.1} parent=1 // loop_footer
      %s20 = sadd.s32 1, %s16
    $region7: #{tpu_custom_call.1} parent=1 // loop_footer_branch
      %15 = sbr.rel target = $region3
    $region8: #{tpu_custom_call.1} parent=1 // loop_exit
      _
    %463 = vsyncpa [#allocation3], 1
    %s464 = scalar_lea.sflag [#allocation3], 1
    %465 = vsyncpa %s464, 1
    %466 = vsyncpa [#allocation6], 1
    %s467 = scalar_lea.sflag [#allocation6], 1
    %468 = vsyncpa %s467, 1
    %469 = vsyncpa [#allocation4], 1
    %s470 = scalar_lea.sflag [#allocation4], 1
    %471 = vsyncpa %s470, 1

</llo_original>
